<compile_context>
chip_gen: v7x
topology: tpu7x:2x2x1
jax: 0.10.0
libtpu: 0.0.40
codegen_flags: <defaults>
</compile_context>

<pallas_src>
import functools

import jax
import jax.numpy as jnp
from jax.experimental import pallas as pl
from jax.experimental.pallas import tpu as pltpu


# ----------------------------------------------------------------------------
# Pallas kernel: out_block = A_hat_rowblock @ (x @ W.T) + b, reduced over k.
# The f32 output block is the accumulator (resident across the reduction axis).
# ----------------------------------------------------------------------------
def _graph_conv_layer_kernel(adj_ref, xw_ref, b_ref, o_ref, *, tk, x_resident):
    k = pl.program_id(1)

    @pl.when(k == 0)
    def _():
        o_ref[...] = jnp.zeros_like(o_ref)

    if x_resident:
        # xw is fully VMEM-resident; slice the (tk, Fout_p) chunk for this step.
        start = pl.multiple_of(k * tk, tk)
        xw = xw_ref[pl.ds(start, tk), :]
    else:
        # Streamed fallback: BlockSpec already delivers the (tk, Fout_p) tile.
        xw = xw_ref[...]

    o_ref[...] += jnp.dot(adj_ref[...], xw, preferred_element_type=jnp.float32)

    @pl.when(k == pl.num_programs(1) - 1)
    def _():
        o_ref[...] += b_ref[...]


# ----------------------------------------------------------------------------
# Helpers
# ----------------------------------------------------------------------------
def _round_up(v, m):
    return ((v + m - 1) // m) * m


def _pad2(a, rows, cols):
    return jnp.pad(a, ((0, rows - a.shape[0]), (0, cols - a.shape[1])))


def build_normalized_adj(edge_index, edge_weight, n, n_rows_p=None, n_cols_p=None):
    """Dense A_hat with A_hat[col, row] += edge_weight / sqrt(d[col] d[row]).

    Scatters straight into an (n_rows_p, n_cols_p) buffer so the pad is fused
    with the build (no extra full-array copy).
    """
    n_rows_p = n if n_rows_p is None else n_rows_p
    n_cols_p = n if n_cols_p is None else n_cols_p
    row, col = edge_index[0], edge_index[1]
    d = jnp.zeros((n,), jnp.float32).at[col].add(1.0)       # degree(col, N)
    d_norm_in = jnp.sqrt(1.0 / d[col])
    d_norm_out = jnp.sqrt(1.0 / d[row])
    value = edge_weight * d_norm_in * d_norm_out
    # posinf -> 0 matches the module's explicit torch.nan_to_num(..., posinf=0.0).
    value = jnp.nan_to_num(value, nan=0.0, posinf=0.0, neginf=0.0)
    adj = jnp.zeros((n_rows_p, n_cols_p), jnp.float32).at[col, row].add(value)
    return adj


# ----------------------------------------------------------------------------
# GraphConvLayer forward (glue in plain JAX, hot path in Pallas)
# ----------------------------------------------------------------------------
def graph_conv_layer_forward(x, edge_index, edge_weight, w, b, *,
                             tm=512, tk=2048, x_resident=None):
    n, _ = x.shape
    f_out = w.shape[0]

    # Clamp tiles to the (128-aligned) problem size so small graphs don't blow
    # up padding; keep them multiples of 128 (lane-aligned, MXU-friendly).
    tm = min(tm, _round_up(n, 128))
    tk = min(tk, _round_up(n, 128))
    # Keep at least 2 row blocks so the "parallel" row axis can shard across the
    # two TensorCores on v7x (one block would idle a core).
    while tm > 256 and _round_up(n, tm) // tm < 2:
        tm //= 2

    n_rows_p = _round_up(n, tm)          # rows of A_hat (destination nodes)
    n_cols_p = _round_up(n, tk)          # cols of A_hat (source nodes)
    fout_p = _round_up(f_out, 128)

    # Normalized adjacency scattered directly into the padded buffer, one cast.
    adj_p = build_normalized_adj(edge_index, edge_weight, n,
                                 n_rows_p, n_cols_p).astype(jnp.bfloat16)

    # Fold the Linear weight into x once: xw = x @ W.T (bias added in-kernel).
    xw = jnp.dot(x, w.T, preferred_element_type=jnp.float32)
    xw_p = _pad2(xw, n_cols_p, fout_p).astype(jnp.bfloat16)         # [Ncols_p, Fout_p]
    b_p = _pad2(b.reshape(1, -1), 1, fout_p).astype(jnp.float32)    # [1, Fout_p]

    # xw is small (N * Fout_p * 2 bytes): keep it fully VMEM-resident (fetched
    # from HBM exactly once) unless it would eat too much VMEM, in which case
    # stream (tk, Fout_p) tiles per reduction step instead.
    xw_bytes = n_cols_p * fout_p * 2
    if x_resident is None:
        x_resident = xw_bytes <= 12 * 1024 * 1024

    grid = (n_rows_p // tm, n_cols_p // tk)

    if x_resident:
        xw_spec = pl.BlockSpec((n_cols_p, fout_p), lambda i, k: (0, 0))
        xw_traffic = xw_bytes                       # loaded exactly once
    else:
        xw_spec = pl.BlockSpec((tk, fout_p), lambda i, k: (k, 0))
        xw_traffic = grid[0] * xw_bytes             # re-streamed per row block

    cost = pl.CostEstimate(
        flops=2 * n_rows_p * n_cols_p * fout_p,
        transcendentals=0,
        bytes_accessed=(adj_p.size * 2 + xw_traffic + b_p.size * 4
                        + n_rows_p * fout_p * 4),
    )

    kernel = functools.partial(_graph_conv_layer_kernel, tk=tk,
                               x_resident=x_resident)

    out = pl.pallas_call(
        kernel,
        out_shape=jax.ShapeDtypeStruct((n_rows_p, fout_p), jnp.float32),
        grid_spec=pltpu.PrefetchScalarGridSpec(
            num_scalar_prefetch=0,
            grid=grid,
            in_specs=[
                pl.BlockSpec((tm, tk), lambda i, k: (i, k)),     # A_hat tile
                xw_spec,                                         # x @ W.T
                pl.BlockSpec((1, fout_p), lambda i, k: (0, 0)),  # bias (resident)
            ],
            out_specs=pl.BlockSpec((tm, fout_p), lambda i, k: (i, 0)),
        ),
        compiler_params=pltpu.CompilerParams(
            # Row axis is independent (megacore-shardable on v7x); reduction axis
            # carries the output-block accumulator -> arbitrary.
            dimension_semantics=("parallel", "arbitrary"),
            # Fits v7x's 64 MiB physical VMEM with headroom; plenty for the plan.
            vmem_limit_bytes=48 * 1024 * 1024,
        ),
        cost_estimate=cost,
    )(adj_p, xw_p, b_p)

    return out[:n, :f_out]


# ----------------------------------------------------------------------------
# References
# ----------------------------------------------------------------------------
def reference_forward_f32(x, edge_index, edge_weight, w, b):
    adj = build_normalized_adj(edge_index, edge_weight, x.shape[0])
    return (adj @ x) @ w.T + b


def reference_forward_bf16(x, edge_index, edge_weight, w, b):
    # Mirrors the kernel numerics: bf16 adjacency, folded xw = x @ W.T in bf16,
    # single aggregation matmul with f32 accumulation, f32 bias add.
    n = x.shape[0]
    adj = build_normalized_adj(edge_index, edge_weight, n).astype(jnp.bfloat16)
    xw = jnp.dot(x, w.T).astype(jnp.bfloat16)
    agg = jnp.dot(adj, xw, preferred_element_type=jnp.float32)
    return agg + b


# ----------------------------------------------------------------------------
# Demo / self-test
# ----------------------------------------------------------------------------
if __name__ == "__main__":
    N, E, IN_C, OUT_C = 200, 800, 48, 96   # deliberately non-128-aligned

    key = jax.random.PRNGKey(0)
    k_x, k_row, k_col, k_ew, k_w, k_b = jax.random.split(key, 6)

    x = jax.random.normal(k_x, (N, IN_C), jnp.float32)
    row = jax.random.randint(k_row, (E,), 0, N, jnp.int32)
    col = jax.random.randint(k_col, (E,), 0, N, jnp.int32)
    edge_index = jnp.stack([row, col], axis=0)          # [2, E]
    edge_weight = jax.random.uniform(k_ew, (E,), jnp.float32)

    w = 0.1 * jax.random.normal(k_w, (OUT_C, IN_C), jnp.float32)  # nn.Linear weight
    b = 0.1 * jax.random.normal(k_b, (OUT_C,), jnp.float32)       # nn.Linear bias

    ref_bf16 = reference_forward_bf16(x, edge_index, edge_weight, w, b)
    ref_f32 = reference_forward_f32(x, edge_index, edge_weight, w, b)

    # 1) Default (large-tile) config; tiles clamp to the small padded problem.
    out = graph_conv_layer_forward(x, edge_index, edge_weight, w, b)
    out = jax.block_until_ready(out)
    assert out.shape == (N, OUT_C)
    assert jnp.allclose(out, ref_bf16, atol=2e-3, rtol=2e-3), "mismatch vs bf16 ref"
    assert jnp.allclose(out, ref_f32, atol=5e-2, rtol=5e-2), "mismatch vs f32 ref"

    # 2) Small tiles -> multi-block grid: exercises accumulation across the
    #    reduction axis, the resident-xw in-kernel slicing, and the bias epilogue.
    out2 = jax.block_until_ready(
        graph_conv_layer_forward(x, edge_index, edge_weight, w, b, tm=128, tk=128))
    assert jnp.allclose(out2, ref_bf16, atol=2e-3, rtol=2e-3), "mismatch (multi-block)"

    # 3) Streamed-x fallback path (used automatically for very large graphs).
    out3 = jax.block_until_ready(
        graph_conv_layer_forward(x, edge_index, edge_weight, w, b,
                                 tm=128, tk=128, x_resident=False))
    assert jnp.allclose(out3, ref_bf16, atol=2e-3, rtol=2e-3), "mismatch (streamed x)"

    print("KERNEL_OK")
</pallas_src>

<mosaic_0001>
module attributes {stable_mosaic.version = 11 : i64} {
  func.func @_graph_conv_layer_kernel(%arg0: i32, %arg1: i32, %arg2: memref<256x256xbf16, #tpu.memory_space<vmem>>, %arg3: memref<256x128xbf16, #tpu.memory_space<vmem>>, %arg4: memref<1x128xf32, #tpu.memory_space<vmem>>, %arg5: memref<256x128xf32, #tpu.memory_space<vmem>>) attributes {dimension_semantics = [#tpu.dimension_semantics<parallel>, #tpu.dimension_semantics<arbitrary>], iteration_bounds = array<i64: 1, 1>, scalar_prefetch = 0 : i64, scratch_operands = 0 : i64, tpu.core_type = #tpu.core_type<tc>, window_params = [{transform_indices = @transform_0, window_bounds = array<i64: 256, 256>}, {pipeline_mode = #tpu.pipeline_mode<synchronous>, transform_indices = @transform_1, window_bounds = array<i64: 256, 128>}, {pipeline_mode = #tpu.pipeline_mode<synchronous>, transform_indices = @transform_2, window_bounds = array<i64: 1, 128>}, {transform_indices = @transform_3, window_bounds = array<i64: 256, 128>}]} {
    %c0_i32 = arith.constant 0 : i32
    %0 = arith.cmpi eq, %arg1, %c0_i32 : i32
    %1 = arith.extui %0 : i1 to i32
    %c0_i32_0 = arith.constant 0 : i32
    %2 = arith.cmpi ne, %1, %c0_i32_0 : i32
    scf.if %2 {
      %cst_9 = arith.constant 0.000000e+00 : f32
      %15 = vector.broadcast %cst_9 : f32 to vector<256x128xf32>
      %c0_10 = arith.constant 0 : index
      %c0_11 = arith.constant 0 : index
      %16 = vector.load %arg5[%c0_10, %c0_11] : memref<256x128xf32, #tpu.memory_space<vmem>>, vector<256x128xf32>
      tpu.vector_store %arg5[%c0_10, %c0_11], %15 {strides = array<i32>} : memref<256x128xf32, #tpu.memory_space<vmem>>, vector<256x128xf32>,
    } else {
    }
    %c256_i32 = arith.constant 256 : i32
    %3 = arith.muli %arg1, %c256_i32 : i32
    %4 = tpu.assume_multiple %3, 256 : i32
    %5 = arith.index_cast %4 : i32 to index
    %c0 = arith.constant 0 : index
    %6 = vector.load %arg3[%5, %c0] : memref<256x128xbf16, #tpu.memory_space<vmem>>, vector<256x128xbf16>
    %c0_1 = arith.constant 0 : index
    %c0_2 = arith.constant 0 : index
    %7 = vector.load %arg5[%c0_1, %c0_2] : memref<256x128xf32, #tpu.memory_space<vmem>>, vector<256x128xf32>
    %c0_3 = arith.constant 0 : index
    %c0_4 = arith.constant 0 : index
    %8 = vector.load %arg2[%c0_3, %c0_4] : memref<256x256xbf16, #tpu.memory_space<vmem>>, vector<256x256xbf16>
    %cst = arith.constant dense<0.000000e+00> : vector<256x128xf32>
    %9 = tpu.matmul %8, %6, %cst {dimension_numbers = #tpu.dot_dimension_numbers<[1], [0], [0], [1], [0, 0, 1, 1], [], []>} : vector<256x256xbf16>, vector<256x128xbf16>, vector<256x128xf32> -> vector<256x128xf32>
    %10 = arith.addf %7, %9 : vector<256x128xf32>
    %c0_5 = arith.constant 0 : index
    %c0_6 = arith.constant 0 : index
    %11 = vector.load %arg5[%c0_5, %c0_6] : memref<256x128xf32, #tpu.memory_space<vmem>>, vector<256x128xf32>
    tpu.vector_store %arg5[%c0_5, %c0_6], %10 {strides = array<i32>} : memref<256x128xf32, #tpu.memory_space<vmem>>, vector<256x128xf32>,
    %c0_i32_7 = arith.constant 0 : i32
    %12 = arith.cmpi eq, %arg1, %c0_i32_7 : i32
    %13 = arith.extui %12 : i1 to i32
    %c0_i32_8 = arith.constant 0 : i32
    %14 = arith.cmpi ne, %13, %c0_i32_8 : i32
    scf.if %14 {
      %c0_9 = arith.constant 0 : index
      %c0_10 = arith.constant 0 : index
      %15 = vector.load %arg5[%c0_9, %c0_10] : memref<256x128xf32, #tpu.memory_space<vmem>>, vector<256x128xf32>
      %c0_11 = arith.constant 0 : index
      %c0_12 = arith.constant 0 : index
      %16 = vector.load %arg4[%c0_11, %c0_12] : memref<1x128xf32, #tpu.memory_space<vmem>>, vector<1x128xf32>
      %17 = vector.broadcast %16 : vector<1x128xf32> to vector<256x128xf32>
      %18 = arith.addf %15, %17 : vector<256x128xf32>
      %c0_13 = arith.constant 0 : index
      %c0_14 = arith.constant 0 : index
      %19 = vector.load %arg5[%c0_13, %c0_14] : memref<256x128xf32, #tpu.memory_space<vmem>>, vector<256x128xf32>
      tpu.vector_store %arg5[%c0_13, %c0_14], %18 {strides = array<i32>} : memref<256x128xf32, #tpu.memory_space<vmem>>, vector<256x128xf32>,
    } else {
    }
    return
  }
  func.func @transform_0(%arg0: i32, %arg1: i32) -> (i32, i32) {
    %c0_i32 = arith.constant 0 : i32
    return %arg0, %arg1 : i32, i32
  }
  func.func @transform_1(%arg0: i32, %arg1: i32) -> (i32, i32) {
    %c0_i32 = arith.constant 0 : i32
    %c0_i32_0 = arith.constant 0 : i32
    %c0_i32_1 = arith.constant 0 : i32
    return %c0_i32, %c0_i32_0 : i32, i32
  }
  func.func @transform_2(%arg0: i32, %arg1: i32) -> (i32, i32) {
    %c0_i32 = arith.constant 0 : i32
    %c0_i32_0 = arith.constant 0 : i32
    %c0_i32_1 = arith.constant 0 : i32
    return %c0_i32, %c0_i32_0 : i32, i32
  }
  func.func @transform_3(%arg0: i32, %arg1: i32) -> (i32, i32) {
    %c0_i32 = arith.constant 0 : i32
    %c0_i32_0 = arith.constant 0 : i32
    return %arg0, %c0_i32 : i32, i32
  }
}

</mosaic_0001>

<llo_original>
// kernel: tpu_custom_call.1
$region0: #{tpu_custom_call.1}
  #allocation0 [shape = 'u32[]', space=smem, size = 0x4, offset = 0x4, fixed_abs, tag = 'smem constant byte address 0x4 - core index']
  #allocation1 [shape = 'u32[144,128]{1,0:T(1,128)}', space=vmem, size = 0x12000, scoped, tag = 'internal scratch']
  %s0 = inlined_call_operand.hbm [shape: bf16[256,256], index: 0, kind: input, shape index: {}]
  %s1 = inlined_call_operand.hbm [shape: bf16[256,128], index: 1, kind: input, shape index: {}]
  %s2 = inlined_call_operand.vmem [shape: f32[1,128], index: 2, kind: input, shape index: {}]
  %s3 = inlined_call_operand.hbm [shape: f32[256,128], index: 3, kind: output, shape index: {}]
  %s4 = sld [smem:[#allocation0]]
  $region38: #{tpu_custom_call.1} parent=0
    _
  %s6 = ssub.s32 1, %s4
  %s7 = scalar_select 0, %s6, %s4
  $region1: #{tpu_custom_call.1} parent=0
    #allocation2 [shape = 'u8[131072]{0}', space=vmem, size = 0x20000, scoped, tag = 'input window, operand 0, single buffered']
    #allocation3 [shape = 's32[1]{0}', space=sflag, size = 0x4, scoped, tag = 'scoped memory for tpu_custom_call.1']
    #allocation4 [shape = 's32[1]{0}', space=sflag, size = 0x4, scoped, tag = 'scoped memory for tpu_custom_call.1']
    #allocation5 [shape = 'u8[65536]{0}', space=vmem, size = 0x10000, scoped, tag = 'input window, operand 1, single buffered']
    #allocation6 [shape = 's32[1]{0}', space=sflag, size = 0x4, scoped, tag = 'scoped memory for tpu_custom_call.1']
    #allocation7 [shape = 'u8[131072]{0}', space=vmem, size = 0x20000, scoped, tag = 'output window, operand 0, single buffered']
    %8 = vsyncpa [#allocation3], 0
    %9 = vsyncpa [#allocation6], 0
    %10 = vsyncpa [#allocation4], 0
    // Predicated region
    $region2: #{tpu_custom_call.1} parent=1 // pred_check
      _
    $region3: #{tpu_custom_call.1} parent=1 // pred_check_branch
      %12 = sbr.rel (0) target = $region5
    $region4: #{tpu_custom_call.1} parent=1 // pred_region
      %s14 = ssub.s32 4096, 4096
      %15 = vsyncadd [#allocation3], %s14
      %s16 = sshll.u32 [#allocation2], 4
      %s17 = int_to_ptr.vmem [resolvable:$true] %s16
      %22 = dma.hbm_to_vmem [thread:$0]  %s0, 4096, %s17, [#allocation3], 128, 128, 8
    $region5: #{tpu_custom_call.1} parent=1 // pred_fallthru
      _
    // Predicated region
    $region6: #{tpu_custom_call.1} parent=1 // pred_check
      _
    $region7: #{tpu_custom_call.1} parent=1 // pred_check_branch
      %24 = sbr.rel (0) target = $region9
    $region8: #{tpu_custom_call.1} parent=1 // pred_region
      %s26 = ssub.s32 2048, 2048
      %27 = vsyncadd [#allocation6], %s26
      %s28 = sshll.u32 [#allocation5], 4
      %s29 = int_to_ptr.vmem [resolvable:$true] %s28
      %34 = dma.hbm_to_vmem [thread:$0]  %s1, 2048, %s29, [#allocation6], 64, 64, 4
    $region9: #{tpu_custom_call.1} parent=1 // pred_fallthru
      _
    // Predicated region
    $region10: #{tpu_custom_call.1} parent=1 // pred_check
      _
    $region11: #{tpu_custom_call.1} parent=1 // pred_check_branch
      %36 = sbr.rel (0) target = $region13
    $region12: #{tpu_custom_call.1} parent=1 // pred_region
      _
    $region13: #{tpu_custom_call.1} parent=1 // pred_fallthru
      _
    // Predicated region
    $region14: #{tpu_custom_call.1} parent=1 // pred_check
      _
    $region15: #{tpu_custom_call.1} parent=1 // pred_check_branch
      %38 = sbr.rel (0) target = $region17
    $region16: #{tpu_custom_call.1} parent=1 // pred_region
      %39 = dma.done [#allocation3], 4096
    $region17: #{tpu_custom_call.1} parent=1 // pred_fallthru
      _
    // Predicated region
    $region18: #{tpu_custom_call.1} parent=1 // pred_check
      _
    $region19: #{tpu_custom_call.1} parent=1 // pred_check_branch
      %41 = sbr.rel (0) target = $region21
    $region20: #{tpu_custom_call.1} parent=1 // pred_region
      %42 = dma.done [#allocation6], 2048
    $region21: #{tpu_custom_call.1} parent=1 // pred_fallthru
      _
    %p44 = scmp.eq.s32.totalorder 0, 0
    // Predicated region
    $region22: #{tpu_custom_call.1} parent=1 // pred_check
      %p45 = pneg %p44
    $region23: #{tpu_custom_call.1} parent=1 // pred_check_branch
      %47 = sbr.rel (%p45) target = $region25
    $region24: #{tpu_custom_call.1} parent=1 // pred_region
      %48 = vst [vmem:[#allocation7] sm:$0xff] 0.0
      %49 = vst [vmem:[#allocation7 + $0x8] sm:$0xff] 0.0
      %50 = vst [vmem:[#allocation7 + $0x10] sm:$0xff] 0.0
      %51 = vst [vmem:[#allocation7 + $0x18] sm:$0xff] 0.0
      %52 = vst [vmem:[#allocation7 + $0x20] sm:$0xff] 0.0
      %53 = vst [vmem:[#allocation7 + $0x28] sm:$0xff] 0.0
      %54 = vst [vmem:[#allocation7 + $0x30] sm:$0xff] 0.0
      %55 = vst [vmem:[#allocation7 + $0x38] sm:$0xff] 0.0
      %56 = vst [vmem:[#allocation7 + $0x40] sm:$0xff] 0.0
      %57 = vst [vmem:[#allocation7 + $0x48] sm:$0xff] 0.0
      %58 = vst [vmem:[#allocation7 + $0x50] sm:$0xff] 0.0
      %59 = vst [vmem:[#allocation7 + $0x58] sm:$0xff] 0.0
      %60 = vst [vmem:[#allocation7 + $0x60] sm:$0xff] 0.0
      %61 = vst [vmem:[#allocation7 + $0x68] sm:$0xff] 0.0
      %62 = vst [vmem:[#allocation7 + $0x70] sm:$0xff] 0.0
      %63 = vst [vmem:[#allocation7 + $0x78] sm:$0xff] 0.0
      %64 = vst [vmem:[#allocation7 + $0x80] sm:$0xff] 0.0
      %65 = vst [vmem:[#allocation7 + $0x88] sm:$0xff] 0.0
      %66 = vst [vmem:[#allocation7 + $0x90] sm:$0xff] 0.0
      %67 = vst [vmem:[#allocation7 + $0x98] sm:$0xff] 0.0
      %68 = vst [vmem:[#allocation7 + $0xa0] sm:$0xff] 0.0
      %69 = vst [vmem:[#allocation7 + $0xa8] sm:$0xff] 0.0
      %70 = vst [vmem:[#allocation7 + $0xb0] sm:$0xff] 0.0
      %71 = vst [vmem:[#allocation7 + $0xb8] sm:$0xff] 0.0
      %72 = vst [vmem:[#allocation7 + $0xc0] sm:$0xff] 0.0
      %73 = vst [vmem:[#allocation7 + $0xc8] sm:$0xff] 0.0
      %74 = vst [vmem:[#allocation7 + $0xd0] sm:$0xff] 0.0
      %75 = vst [vmem:[#allocation7 + $0xd8] sm:$0xff] 0.0
      %76 = vst [vmem:[#allocation7 + $0xe0] sm:$0xff] 0.0
      %77 = vst [vmem:[#allocation7 + $0xe8] sm:$0xff] 0.0
      %78 = vst [vmem:[#allocation7 + $0xf0] sm:$0xff] 0.0
      %79 = vst [vmem:[#allocation7 + $0xf8] sm:$0xff] 0.0
    $region25: #{tpu_custom_call.1} parent=1 // pred_fallthru
      _
    %s80 = smul.u32 0, 256
    %s81 = sshra.s32 %s80, 3
    %s82 = sand.u32 %s80, 7
    %s83 = smul.addr %s81, 4
    %s84 = scalar_lea.vmem [#allocation5], %s83
    %v85 = vld [vmem:[%s84] sm:$0xf]
    %v86 = vld [vmem:[%s84 + $0x4] sm:$0xf]
    %v87 = vld [vmem:[%s84 + $0x8] sm:$0xf]
    %v88 = vld [vmem:[%s84 + $0xc] sm:$0xf]
    %v89 = vld [vmem:[%s84 + $0x10] sm:$0xf]
    %v90 = vld [vmem:[%s84 + $0x14] sm:$0xf]
    %v91 = vld [vmem:[%s84 + $0x18] sm:$0xf]
    %v92 = vld [vmem:[%s84 + $0x1c] sm:$0xf]
    %v93 = vld [vmem:[%s84 + $0x20] sm:$0xf]
    %v94 = vld [vmem:[%s84 + $0x24] sm:$0xf]
    %v95 = vld [vmem:[%s84 + $0x28] sm:$0xf]
    %v96 = vld [vmem:[%s84 + $0x2c] sm:$0xf]
    %v97 = vld [vmem:[%s84 + $0x30] sm:$0xf]
    %v98 = vld [vmem:[%s84 + $0x34] sm:$0xf]
    %v99 = vld [vmem:[%s84 + $0x38] sm:$0xf]
    %v100 = vld [vmem:[%s84 + $0x3c] sm:$0xf]
    %v101 = vld [vmem:[%s84 + $0x40] sm:$0xf]
    %v102 = vld [vmem:[%s84 + $0x44] sm:$0xf]
    %v103 = vld [vmem:[%s84 + $0x48] sm:$0xf]
    %v104 = vld [vmem:[%s84 + $0x4c] sm:$0xf]
    %v105 = vld [vmem:[%s84 + $0x50] sm:$0xf]
    %v106 = vld [vmem:[%s84 + $0x54] sm:$0xf]
    %v107 = vld [vmem:[%s84 + $0x58] sm:$0xf]
    %v108 = vld [vmem:[%s84 + $0x5c] sm:$0xf]
    %v109 = vld [vmem:[%s84 + $0x60] sm:$0xf]
    %v110 = vld [vmem:[%s84 + $0x64] sm:$0xf]
    %v111 = vld [vmem:[%s84 + $0x68] sm:$0xf]
    %v112 = vld [vmem:[%s84 + $0x6c] sm:$0xf]
    %v113 = vld [vmem:[%s84 + $0x70] sm:$0xf]
    %v114 = vld [vmem:[%s84 + $0x74] sm:$0xf]
    %v115 = vld [vmem:[%s84 + $0x78] sm:$0xf]
    %v116 = vld [vmem:[%s84 + $0x7c] sm:$0xf]
    %v117 = vld [vmem:[#allocation7] sm:$0xff]
    %v118 = vld [vmem:[#allocation7 + $0x8] sm:$0xff]
    %v119 = vld [vmem:[#allocation7 + $0x10] sm:$0xff]
    %v120 = vld [vmem:[#allocation7 + $0x18] sm:$0xff]
    %v121 = vld [vmem:[#allocation7 + $0x20] sm:$0xff]
    %v122 = vld [vmem:[#allocation7 + $0x28] sm:$0xff]
    %v123 = vld [vmem:[#allocation7 + $0x30] sm:$0xff]
    %v124 = vld [vmem:[#allocation7 + $0x38] sm:$0xff]
    %v125 = vld [vmem:[#allocation7 + $0x40] sm:$0xff]
    %v126 = vld [vmem:[#allocation7 + $0x48] sm:$0xff]
    %v127 = vld [vmem:[#allocation7 + $0x50] sm:$0xff]
    %v128 = vld [vmem:[#allocation7 + $0x58] sm:$0xff]
    %v129 = vld [vmem:[#allocation7 + $0x60] sm:$0xff]
    %v130 = vld [vmem:[#allocation7 + $0x68] sm:$0xff]
    %v131 = vld [vmem:[#allocation7 + $0x70] sm:$0xff]
    %v132 = vld [vmem:[#allocation7 + $0x78] sm:$0xff]
    %v133 = vld [vmem:[#allocation7 + $0x80] sm:$0xff]
    %v134 = vld [vmem:[#allocation7 + $0x88] sm:$0xff]
    %v135 = vld [vmem:[#allocation7 + $0x90] sm:$0xff]
    %v136 = vld [vmem:[#allocation7 + $0x98] sm:$0xff]
    %v137 = vld [vmem:[#allocation7 + $0xa0] sm:$0xff]
    %v138 = vld [vmem:[#allocation7 + $0xa8] sm:$0xff]
    %v139 = vld [vmem:[#allocation7 + $0xb0] sm:$0xff]
    %v140 = vld [vmem:[#allocation7 + $0xb8] sm:$0xff]
    %v141 = vld [vmem:[#allocation7 + $0xc0] sm:$0xff]
    %v142 = vld [vmem:[#allocation7 + $0xc8] sm:$0xff]
    %v143 = vld [vmem:[#allocation7 + $0xd0] sm:$0xff]
    %v144 = vld [vmem:[#allocation7 + $0xd8] sm:$0xff]
    %v145 = vld [vmem:[#allocation7 + $0xe0] sm:$0xff]
    %v146 = vld [vmem:[#allocation7 + $0xe8] sm:$0xff]
    %v147 = vld [vmem:[#allocation7 + $0xf0] sm:$0xff]
    %v148 = vld [vmem:[#allocation7 + $0xf8] sm:$0xff]
    %v149 = vld [vmem:[#allocation2] sm:$0xff]
    %v150 = vld [vmem:[#allocation2 + $0x8] sm:$0xff]
    %v151 = vld [vmem:[#allocation2 + $0x10] sm:$0xff]
    %v152 = vld [vmem:[#allocation2 + $0x18] sm:$0xff]
    %v153 = vld [vmem:[#allocation2 + $0x20] sm:$0xff]
    %v154 = vld [vmem:[#allocation2 + $0x28] sm:$0xff]
    %v155 = vld [vmem:[#allocation2 + $0x30] sm:$0xff]
    %v156 = vld [vmem:[#allocation2 + $0x38] sm:$0xff]
    %v157 = vld [vmem:[#allocation2 + $0x40] sm:$0xff]
    %v158 = vld [vmem:[#allocation2 + $0x48] sm:$0xff]
    %v159 = vld [vmem:[#allocation2 + $0x50] sm:$0xff]
    %v160 = vld [vmem:[#allocation2 + $0x58] sm:$0xff]
    %v161 = vld [vmem:[#allocation2 + $0x60] sm:$0xff]
    %v162 = vld [vmem:[#allocation2 + $0x68] sm:$0xff]
    %v163 = vld [vmem:[#allocation2 + $0x70] sm:$0xff]
    %v164 = vld [vmem:[#allocation2 + $0x78] sm:$0xff]
    %v165 = vld [vmem:[#allocation2 + $0x80] sm:$0xff]
    %v166 = vld [vmem:[#allocation2 + $0x88] sm:$0xff]
    %v167 = vld [vmem:[#allocation2 + $0x90] sm:$0xff]
    %v168 = vld [vmem:[#allocation2 + $0x98] sm:$0xff]
    %v169 = vld [vmem:[#allocation2 + $0xa0] sm:$0xff]
    %v170 = vld [vmem:[#allocation2 + $0xa8] sm:$0xff]
    %v171 = vld [vmem:[#allocation2 + $0xb0] sm:$0xff]
    %v172 = vld [vmem:[#allocation2 + $0xb8] sm:$0xff]
    %v173 = vld [vmem:[#allocation2 + $0xc0] sm:$0xff]
    %v174 = vld [vmem:[#allocation2 + $0xc8] sm:$0xff]
    %v175 = vld [vmem:[#allocation2 + $0xd0] sm:$0xff]
    %v176 = vld [vmem:[#allocation2 + $0xd8] sm:$0xff]
    %v177 = vld [vmem:[#allocation2 + $0xe0] sm:$0xff]
    %v178 = vld [vmem:[#allocation2 + $0xe8] sm:$0xff]
    %v179 = vld [vmem:[#allocation2 + $0xf0] sm:$0xff]
    %v180 = vld [vmem:[#allocation2 + $0xf8] sm:$0xff]
    %v213 = vunpack.c.l.b16 %v149
    %v214 = vunpack.c.h.b16 %v149
    %v215 = vunpack.c.l.b16 %v150
    %v216 = vunpack.c.h.b16 %v150
    %v217 = vunpack.c.l.b16 %v151
    %v218 = vunpack.c.h.b16 %v151
    %v219 = vunpack.c.l.b16 %v152
    %v220 = vunpack.c.h.b16 %v152
    %v221 = vunpack.c.l.b16 %v153
    %v222 = vunpack.c.h.b16 %v153
    %v223 = vunpack.c.l.b16 %v154
    %v224 = vunpack.c.h.b16 %v154
    %v225 = vunpack.c.l.b16 %v155
    %v226 = vunpack.c.h.b16 %v155
    %v227 = vunpack.c.l.b16 %v156
    %v228 = vunpack.c.h.b16 %v156
    %v229 = vunpack.c.l.b16 %v157
    %v230 = vunpack.c.h.b16 %v157
    %v231 = vunpack.c.l.b16 %v158
    %v232 = vunpack.c.h.b16 %v158
    %v233 = vunpack.c.l.b16 %v159
    %v234 = vunpack.c.h.b16 %v159
    %v235 = vunpack.c.l.b16 %v160
    %v236 = vunpack.c.h.b16 %v160
    %v237 = vunpack.c.l.b16 %v161
    %v238 = vunpack.c.h.b16 %v161
    %v239 = vunpack.c.l.b16 %v162
    %v240 = vunpack.c.h.b16 %v162
    %v241 = vunpack.c.l.b16 %v163
    %v242 = vunpack.c.h.b16 %v163
    %v243 = vunpack.c.l.b16 %v164
    %v244 = vunpack.c.h.b16 %v164
    %v245 = vunpack.c.l.b16 %v165
    %v246 = vunpack.c.h.b16 %v165
    %v247 = vunpack.c.l.b16 %v166
    %v248 = vunpack.c.h.b16 %v166
    %v249 = vunpack.c.l.b16 %v167
    %v250 = vunpack.c.h.b16 %v167
    %v251 = vunpack.c.l.b16 %v168
    %v252 = vunpack.c.h.b16 %v168
    %v253 = vunpack.c.l.b16 %v169
    %v254 = vunpack.c.h.b16 %v169
    %v255 = vunpack.c.l.b16 %v170
    %v256 = vunpack.c.h.b16 %v170
    %v257 = vunpack.c.l.b16 %v171
    %v258 = vunpack.c.h.b16 %v171
    %v259 = vunpack.c.l.b16 %v172
    %v260 = vunpack.c.h.b16 %v172
    %v261 = vunpack.c.l.b16 %v173
    %v262 = vunpack.c.h.b16 %v173
    %v263 = vunpack.c.l.b16 %v174
    %v264 = vunpack.c.h.b16 %v174
    %v265 = vunpack.c.l.b16 %v175
    %v266 = vunpack.c.h.b16 %v175
    %v267 = vunpack.c.l.b16 %v176
    %v268 = vunpack.c.h.b16 %v176
    %v269 = vunpack.c.l.b16 %v177
    %v270 = vunpack.c.h.b16 %v177
    %v271 = vunpack.c.l.b16 %v178
    %v272 = vunpack.c.h.b16 %v178
    %v273 = vunpack.c.l.b16 %v179
    %v274 = vunpack.c.h.b16 %v179
    %v275 = vunpack.c.l.b16 %v180
    %v276 = vunpack.c.h.b16 %v180
    %v277 = vpack.c.b16 %v215, %v213
    %v278 = vpack.c.b16 %v216, %v214
    %v279 = vpack.c.b16 %v219, %v217
    %v280 = vpack.c.b16 %v220, %v218
    %v281 = vpack.c.b16 %v223, %v221
    %v282 = vpack.c.b16 %v224, %v222
    %v283 = vpack.c.b16 %v227, %v225
    %v284 = vpack.c.b16 %v228, %v226
    %v285 = vpack.c.b16 %v231, %v229
    %v286 = vpack.c.b16 %v232, %v230
    %v287 = vpack.c.b16 %v235, %v233
    %v288 = vpack.c.b16 %v236, %v234
    %v289 = vpack.c.b16 %v239, %v237
    %v290 = vpack.c.b16 %v240, %v238
    %v291 = vpack.c.b16 %v243, %v241
    %v292 = vpack.c.b16 %v244, %v242
    %v293 = vpack.c.b16 %v247, %v245
    %v294 = vpack.c.b16 %v248, %v246
    %v295 = vpack.c.b16 %v251, %v249
    %v296 = vpack.c.b16 %v252, %v250
    %v297 = vpack.c.b16 %v255, %v253
    %v298 = vpack.c.b16 %v256, %v254
    %v299 = vpack.c.b16 %v259, %v257
    %v300 = vpack.c.b16 %v260, %v258
    %v301 = vpack.c.b16 %v263, %v261
    %v302 = vpack.c.b16 %v264, %v262
    %v303 = vpack.c.b16 %v267, %v265
    %v304 = vpack.c.b16 %v268, %v266
    %v305 = vpack.c.b16 %v271, %v269
    %v306 = vpack.c.b16 %v272, %v270
    %v307 = vpack.c.b16 %v275, %v273
    %v308 = vpack.c.b16 %v276, %v274
    %v373 = vunpack.c.l.b16 %v85
    %v374 = vunpack.c.l.b16 %v86
    %v375 = vunpack.c.l.b16 %v87
    %v376 = vunpack.c.l.b16 %v88
    %v377 = vunpack.c.l.b16 %v89
    %v378 = vunpack.c.l.b16 %v90
    %v379 = vunpack.c.l.b16 %v91
    %v380 = vunpack.c.l.b16 %v92
    %v381 = vunpack.c.l.b16 %v93
    %v382 = vunpack.c.l.b16 %v94
    %v383 = vunpack.c.l.b16 %v95
    %v384 = vunpack.c.l.b16 %v96
    %v385 = vunpack.c.l.b16 %v97
    %v386 = vunpack.c.l.b16 %v98
    %v387 = vunpack.c.l.b16 %v99
    %v388 = vunpack.c.l.b16 %v100
    %v389 = vunpack.c.l.b16 %v101
    %v390 = vunpack.c.l.b16 %v102
    %v391 = vunpack.c.l.b16 %v103
    %v392 = vunpack.c.l.b16 %v104
    %v393 = vunpack.c.l.b16 %v105
    %v394 = vunpack.c.l.b16 %v106
    %v395 = vunpack.c.l.b16 %v107
    %v396 = vunpack.c.l.b16 %v108
    %v397 = vunpack.c.l.b16 %v109
    %v398 = vunpack.c.l.b16 %v110
    %v399 = vunpack.c.l.b16 %v111
    %v400 = vunpack.c.l.b16 %v112
    %v401 = vunpack.c.l.b16 %v113
    %v402 = vunpack.c.l.b16 %v114
    %v403 = vunpack.c.l.b16 %v115
    %v404 = vunpack.c.l.b16 %v116
    %v405 = vpack.c.b16 %v374, %v373
    %v406 = vpack.c.b16 %v376, %v375
    %v407 = vpack.c.b16 %v378, %v377
    %v408 = vpack.c.b16 %v380, %v379
    %v409 = vpack.c.b16 %v382, %v381
    %v410 = vpack.c.b16 %v384, %v383
    %v411 = vpack.c.b16 %v386, %v385
    %v412 = vpack.c.b16 %v388, %v387
    %v413 = vpack.c.b16 %v390, %v389
    %v414 = vpack.c.b16 %v392, %v391
    %v415 = vpack.c.b16 %v394, %v393
    %v416 = vpack.c.b16 %v396, %v395
    %v417 = vpack.c.b16 %v398, %v397
    %v418 = vpack.c.b16 %v400, %v399
    %v419 = vpack.c.b16 %v402, %v401
    %v420 = vpack.c.b16 %v404, %v403
    %437 = vmatprep.subr.bf16.mxu0 0
    %438 = vmatpush1.bf16.msra.mxu0 %v405
    %439 = vmatprep.subr.bf16.mxu0 0
    %440 = vmatpush1.bf16.msra.mxu0 %v406
    %441 = vmatprep.subr.bf16.mxu0 0
    %442 = vmatpush1.bf16.msra.mxu0 %v407
    %443 = vmatprep.subr.bf16.mxu0 0
    %444 = vmatpush1.bf16.msra.mxu0 %v408
    %445 = vmatprep.subr.bf16.mxu0 0
    %446 = vmatpush1.bf16.msra.mxu0 %v409
    %447 = vmatprep.subr.bf16.mxu0 0
    %448 = vmatpush1.bf16.msra.mxu0 %v410
    %449 = vmatprep.subr.bf16.mxu0 0
    %450 = vmatpush1.bf16.msra.mxu0 %v411
    %451 = vmatprep.subr.bf16.mxu0 0
    %452 = vmatpush1.bf16.msra.mxu0 %v412
    %453 = vmatprep.subr.bf16.mxu0 0
    %454 = vmatpush1.bf16.msra.mxu0 %v413
    %455 = vmatprep.subr.bf16.mxu0 0
    %456 = vmatpush1.bf16.msra.mxu0 %v414
    %457 = vmatprep.subr.bf16.mxu0 0
    %458 = vmatpush1.bf16.msra.mxu0 %v415
    %459 = vmatprep.subr.bf16.mxu0 0
    %460 = vmatpush1.bf16.msra.mxu0 %v416
    %461 = vmatprep.subr.bf16.mxu0 0
    %462 = vmatpush1.bf16.msra.mxu0 %v417
    %463 = vmatprep.subr.bf16.mxu0 0
    %464 = vmatpush1.bf16.msra.mxu0 %v418
    %465 = vmatprep.subr.bf16.mxu0 0
    %466 = vmatpush1.bf16.msra.mxu0 %v419
    %467 = vmatprep.subr.bf16.mxu0 0
    %468 = vmatpush1.bf16.msra.mxu0 %v420
    %469 = vmatprep.mubr.bf16.mxu0 %v278
    %470 = vmatmul.mubr.bf16.gmra.mrb[0].mxu0 %v277
    %v471 = vpop.f32.mrb[0].mxu0
    %v472 = vadd.f32 0.0, %v471
    %v473 = vpop.f32.mrb[0].mxu0
    %v474 = vpop.f32.mrb[0].mxu0
    %v475 = vadd.f32 0.0, %v474
    %v476 = vpop.f32.mrb[0].mxu0
    %477 = vmatprep.mubr.bf16.mxu0 %v280
    %478 = vmatmul.mubr.bf16.gmra.mrb[0].mxu0 %v279
    %v479 = vpop.f32.mrb[0].mxu0
    %v480 = vadd.f32 0.0, %v479
    %v481 = vpop.f32.mrb[0].mxu0
    %v482 = vpop.f32.mrb[0].mxu0
    %v483 = vadd.f32 0.0, %v482
    %v484 = vpop.f32.mrb[0].mxu0
    %485 = vmatprep.mubr.bf16.mxu0 %v282
    %486 = vmatmul.mubr.bf16.gmra.mrb[0].mxu0 %v281
    %v487 = vpop.f32.mrb[0].mxu0
    %v488 = vadd.f32 0.0, %v487
    %v489 = vpop.f32.mrb[0].mxu0
    %v490 = vpop.f32.mrb[0].mxu0
    %v491 = vadd.f32 0.0, %v490
    %v492 = vpop.f32.mrb[0].mxu0
    %493 = vmatprep.mubr.bf16.mxu0 %v284
    %494 = vmatmul.mubr.bf16.gmra.mrb[0].mxu0 %v283
    %v495 = vpop.f32.mrb[0].mxu0
    %v496 = vadd.f32 0.0, %v495
    %v497 = vpop.f32.mrb[0].mxu0
    %v498 = vpop.f32.mrb[0].mxu0
    %v499 = vadd.f32 0.0, %v498
    %v500 = vpop.f32.mrb[0].mxu0
    %501 = vmatprep.mubr.bf16.mxu0 %v286
    %502 = vmatmul.mubr.bf16.gmra.mrb[0].mxu0 %v285
    %v503 = vpop.f32.mrb[0].mxu0
    %v504 = vadd.f32 0.0, %v503
    %v505 = vpop.f32.mrb[0].mxu0
    %v506 = vpop.f32.mrb[0].mxu0
    %v507 = vadd.f32 0.0, %v506
    %v508 = vpop.f32.mrb[0].mxu0
    %509 = vmatprep.mubr.bf16.mxu0 %v288
    %510 = vmatmul.mubr.bf16.gmra.mrb[0].mxu0 %v287
    %v511 = vpop.f32.mrb[0].mxu0
    %v512 = vadd.f32 0.0, %v511
    %v513 = vpop.f32.mrb[0].mxu0
    %v514 = vpop.f32.mrb[0].mxu0
    %v515 = vadd.f32 0.0, %v514
    %v516 = vpop.f32.mrb[0].mxu0
    %517 = vmatprep.mubr.bf16.mxu0 %v290
    %518 = vmatmul.mubr.bf16.gmra.mrb[0].mxu0 %v289
    %v519 = vpop.f32.mrb[0].mxu0
    %v520 = vadd.f32 0.0, %v519
    %v521 = vpop.f32.mrb[0].mxu0
    %v522 = vpop.f32.mrb[0].mxu0
    %v523 = vadd.f32 0.0, %v522
    %v524 = vpop.f32.mrb[0].mxu0
    %525 = vmatprep.mubr.bf16.mxu0 %v292
    %526 = vmatmul.mubr.bf16.gmra.mrb[0].mxu0 %v291
    %v527 = vpop.f32.mrb[0].mxu0
    %v528 = vadd.f32 0.0, %v527
    %v529 = vpop.f32.mrb[0].mxu0
    %v530 = vpop.f32.mrb[0].mxu0
    %v531 = vadd.f32 0.0, %v530
    %v532 = vpop.f32.mrb[0].mxu0
    %533 = vmatprep.mubr.bf16.mxu0 %v294
    %534 = vmatmul.mubr.bf16.gmra.mrb[0].mxu0 %v293
    %v535 = vpop.f32.mrb[0].mxu0
    %v536 = vadd.f32 0.0, %v535
    %v537 = vpop.f32.mrb[0].mxu0
    %v538 = vpop.f32.mrb[0].mxu0
    %v539 = vadd.f32 0.0, %v538
    %v540 = vpop.f32.mrb[0].mxu0
    %541 = vmatprep.mubr.bf16.mxu0 %v296
    %542 = vmatmul.mubr.bf16.gmra.mrb[0].mxu0 %v295
    %v543 = vpop.f32.mrb[0].mxu0
    %v544 = vadd.f32 0.0, %v543
    %v545 = vpop.f32.mrb[0].mxu0
    %v546 = vpop.f32.mrb[0].mxu0
    %v547 = vadd.f32 0.0, %v546
    %v548 = vpop.f32.mrb[0].mxu0
    %549 = vmatprep.mubr.bf16.mxu0 %v298
    %550 = vmatmul.mubr.bf16.gmra.mrb[0].mxu0 %v297
    %v551 = vpop.f32.mrb[0].mxu0
    %v552 = vadd.f32 0.0, %v551
    %v553 = vpop.f32.mrb[0].mxu0
    %v554 = vpop.f32.mrb[0].mxu0
    %v555 = vadd.f32 0.0, %v554
    %v556 = vpop.f32.mrb[0].mxu0
    %557 = vmatprep.mubr.bf16.mxu0 %v300
    %558 = vmatmul.mubr.bf16.gmra.mrb[0].mxu0 %v299
    %v559 = vpop.f32.mrb[0].mxu0
    %v560 = vadd.f32 0.0, %v559
    %v561 = vpop.f32.mrb[0].mxu0
    %v562 = vpop.f32.mrb[0].mxu0
    %v563 = vadd.f32 0.0, %v562
    %v564 = vpop.f32.mrb[0].mxu0
    %565 = vmatprep.mubr.bf16.mxu0 %v302
    %566 = vmatmul.mubr.bf16.gmra.mrb[0].mxu0 %v301
    %v567 = vpop.f32.mrb[0].mxu0
    %v568 = vadd.f32 0.0, %v567
    %v569 = vpop.f32.mrb[0].mxu0
    %v570 = vpop.f32.mrb[0].mxu0
    %v571 = vadd.f32 0.0, %v570
    %v572 = vpop.f32.mrb[0].mxu0
    %573 = vmatprep.mubr.bf16.mxu0 %v304
    %574 = vmatmul.mubr.bf16.gmra.mrb[0].mxu0 %v303
    %v575 = vpop.f32.mrb[0].mxu0
    %v576 = vadd.f32 0.0, %v575
    %v577 = vpop.f32.mrb[0].mxu0
    %v578 = vpop.f32.mrb[0].mxu0
    %v579 = vadd.f32 0.0, %v578
    %v580 = vpop.f32.mrb[0].mxu0
    %581 = vmatprep.mubr.bf16.mxu0 %v306
    %582 = vmatmul.mubr.bf16.gmra.mrb[0].mxu0 %v305
    %v583 = vpop.f32.mrb[0].mxu0
    %v584 = vadd.f32 0.0, %v583
    %v585 = vpop.f32.mrb[0].mxu0
    %v586 = vpop.f32.mrb[0].mxu0
    %v587 = vadd.f32 0.0, %v586
    %v588 = vpop.f32.mrb[0].mxu0
    %589 = vmatprep.mubr.bf16.mxu0 %v308
    %590 = vmatmul.mubr.bf16.gmra.mrb[0].mxu0 %v307
    %v591 = vpop.f32.mrb[0].mxu0
    %v592 = vadd.f32 0.0, %v591
    %v593 = vpop.f32.mrb[0].mxu0
    %v594 = vpop.f32.mrb[0].mxu0
    %v595 = vadd.f32 0.0, %v594
    %v596 = vpop.f32.mrb[0].mxu0
    %597 = vdwg.mxu0
    %v598 = vadd.f32 %v117, %v472
    %v599 = vadd.f32 %v118, %v475
    %v600 = vadd.f32 %v119, %v480
    %v601 = vadd.f32 %v120, %v483
    %v602 = vadd.f32 %v121, %v488
    %v603 = vadd.f32 %v122, %v491
    %v604 = vadd.f32 %v123, %v496
    %v605 = vadd.f32 %v124, %v499
    %v606 = vadd.f32 %v125, %v504
    %v607 = vadd.f32 %v126, %v507
    %v608 = vadd.f32 %v127, %v512
    %v609 = vadd.f32 %v128, %v515
    %v610 = vadd.f32 %v129, %v520
    %v611 = vadd.f32 %v130, %v523
    %v612 = vadd.f32 %v131, %v528
    %v613 = vadd.f32 %v132, %v531
    %v614 = vadd.f32 %v133, %v536
    %v615 = vadd.f32 %v134, %v539
    %v616 = vadd.f32 %v135, %v544
    %v617 = vadd.f32 %v136, %v547
    %v618 = vadd.f32 %v137, %v552
    %v619 = vadd.f32 %v138, %v555
    %v620 = vadd.f32 %v139, %v560
    %v621 = vadd.f32 %v140, %v563
    %v622 = vadd.f32 %v141, %v568
    %v623 = vadd.f32 %v142, %v571
    %v624 = vadd.f32 %v143, %v576
    %v625 = vadd.f32 %v144, %v579
    %v626 = vadd.f32 %v145, %v584
    %v627 = vadd.f32 %v146, %v587
    %v628 = vadd.f32 %v147, %v592
    %v629 = vadd.f32 %v148, %v595
    %630 = vst [vmem:[#allocation7] sm:$0xff] %v598
    %631 = vst [vmem:[#allocation7 + $0x8] sm:$0xff] %v599
    %632 = vst [vmem:[#allocation7 + $0x10] sm:$0xff] %v600
    %633 = vst [vmem:[#allocation7 + $0x18] sm:$0xff] %v601
    %634 = vst [vmem:[#allocation7 + $0x20] sm:$0xff] %v602
    %635 = vst [vmem:[#allocation7 + $0x28] sm:$0xff] %v603
    %636 = vst [vmem:[#allocation7 + $0x30] sm:$0xff] %v604
    %637 = vst [vmem:[#allocation7 + $0x38] sm:$0xff] %v605
    %638 = vst [vmem:[#allocation7 + $0x40] sm:$0xff] %v606
    %639 = vst [vmem:[#allocation7 + $0x48] sm:$0xff] %v607
    %640 = vst [vmem:[#allocation7 + $0x50] sm:$0xff] %v608
    %641 = vst [vmem:[#allocation7 + $0x58] sm:$0xff] %v609
    %642 = vst [vmem:[#allocation7 + $0x60] sm:$0xff] %v610
    %643 = vst [vmem:[#allocation7 + $0x68] sm:$0xff] %v611
    %644 = vst [vmem:[#allocation7 + $0x70] sm:$0xff] %v612
    %645 = vst [vmem:[#allocation7 + $0x78] sm:$0xff] %v613
    %646 = vst [vmem:[#allocation7 + $0x80] sm:$0xff] %v614
    %647 = vst [vmem:[#allocation7 + $0x88] sm:$0xff] %v615
    %648 = vst [vmem:[#allocation7 + $0x90] sm:$0xff] %v616
    %649 = vst [vmem:[#allocation7 + $0x98] sm:$0xff] %v617
    %650 = vst [vmem:[#allocation7 + $0xa0] sm:$0xff] %v618
    %651 = vst [vmem:[#allocation7 + $0xa8] sm:$0xff] %v619
    %652 = vst [vmem:[#allocation7 + $0xb0] sm:$0xff] %v620
    %653 = vst [vmem:[#allocation7 + $0xb8] sm:$0xff] %v621
    %654 = vst [vmem:[#allocation7 + $0xc0] sm:$0xff] %v622
    %655 = vst [vmem:[#allocation7 + $0xc8] sm:$0xff] %v623
    %656 = vst [vmem:[#allocation7 + $0xd0] sm:$0xff] %v624
    %657 = vst [vmem:[#allocation7 + $0xd8] sm:$0xff] %v625
    %658 = vst [vmem:[#allocation7 + $0xe0] sm:$0xff] %v626
    %659 = vst [vmem:[#allocation7 + $0xe8] sm:$0xff] %v627
    %660 = vst [vmem:[#allocation7 + $0xf0] sm:$0xff] %v628
    %661 = vst [vmem:[#allocation7 + $0xf8] sm:$0xff] %v629
    // Predicated region
    $region26: #{tpu_custom_call.1} parent=1 // pred_check
      %p662 = pneg %p44
    $region27: #{tpu_custom_call.1} parent=1 // pred_check_branch
      %664 = sbr.rel (%p662) target = $region29
    $region28: #{tpu_custom_call.1} parent=1 // pred_region
      %v665 = vld [vmem:[#allocation7] sm:$0xff]
      %v666 = vld [vmem:[#allocation7 + $0x8] sm:$0xff]
      %v667 = vld [vmem:[#allocation7 + $0x10] sm:$0xff]
      %v668 = vld [vmem:[#allocation7 + $0x18] sm:$0xff]
      %v669 = vld [vmem:[#allocation7 + $0x20] sm:$0xff]
      %v670 = vld [vmem:[#allocation7 + $0x28] sm:$0xff]
      %v671 = vld [vmem:[#allocation7 + $0x30] sm:$0xff]
      %v672 = vld [vmem:[#allocation7 + $0x38] sm:$0xff]
      %v673 = vld [vmem:[#allocation7 + $0x40] sm:$0xff]
      %v674 = vld [vmem:[#allocation7 + $0x48] sm:$0xff]
      %v675 = vld [vmem:[#allocation7 + $0x50] sm:$0xff]
      %v676 = vld [vmem:[#allocation7 + $0x58] sm:$0xff]
      %v677 = vld [vmem:[#allocation7 + $0x60] sm:$0xff]
      %v678 = vld [vmem:[#allocation7 + $0x68] sm:$0xff]
      %v679 = vld [vmem:[#allocation7 + $0x70] sm:$0xff]
      %v680 = vld [vmem:[#allocation7 + $0x78] sm:$0xff]
      %v681 = vld [vmem:[#allocation7 + $0x80] sm:$0xff]
      %v682 = vld [vmem:[#allocation7 + $0x88] sm:$0xff]
      %v683 = vld [vmem:[#allocation7 + $0x90] sm:$0xff]
      %v684 = vld [vmem:[#allocation7 + $0x98] sm:$0xff]
      %v685 = vld [vmem:[#allocation7 + $0xa0] sm:$0xff]
      %v686 = vld [vmem:[#allocation7 + $0xa8] sm:$0xff]
      %v687 = vld [vmem:[#allocation7 + $0xb0] sm:$0xff]
      %v688 = vld [vmem:[#allocation7 + $0xb8] sm:$0xff]
      %v689 = vld [vmem:[#allocation7 + $0xc0] sm:$0xff]
      %v690 = vld [vmem:[#allocation7 + $0xc8] sm:$0xff]
      %v691 = vld [vmem:[#allocation7 + $0xd0] sm:$0xff]
      %v692 = vld [vmem:[#allocation7 + $0xd8] sm:$0xff]
      %v693 = vld [vmem:[#allocation7 + $0xe0] sm:$0xff]
      %v694 = vld [vmem:[#allocation7 + $0xe8] sm:$0xff]
      %v695 = vld [vmem:[#allocation7 + $0xf0] sm:$0xff]
      %v696 = vld [vmem:[#allocation7 + $0xf8] sm:$0xff]
      %v697 = vld [vmem:[%s2] sm:$0x1]
      %v699 = vlaneseq
      %v700 = vshrl.u32 %v699, 7
      %v701 = vsub.s32 0, %v700
      %v702 = vrot.slane %v697, %v701
      %v704 = vadd.f32 %v665, %v702
      %v705 = vadd.f32 %v666, %v702
      %v706 = vadd.f32 %v667, %v702
      %v707 = vadd.f32 %v668, %v702
      %v708 = vadd.f32 %v669, %v702
      %v709 = vadd.f32 %v670, %v702
      %v710 = vadd.f32 %v671, %v702
      %v711 = vadd.f32 %v672, %v702
      %v712 = vadd.f32 %v673, %v702
      %v713 = vadd.f32 %v674, %v702
      %v714 = vadd.f32 %v675, %v702
      %v715 = vadd.f32 %v676, %v702
      %v716 = vadd.f32 %v677, %v702
      %v717 = vadd.f32 %v678, %v702
      %v718 = vadd.f32 %v679, %v702
      %v719 = vadd.f32 %v680, %v702
      %v720 = vadd.f32 %v681, %v702
      %v721 = vadd.f32 %v682, %v702
      %v722 = vadd.f32 %v683, %v702
      %v723 = vadd.f32 %v684, %v702
      %v724 = vadd.f32 %v685, %v702
      %v725 = vadd.f32 %v686, %v702
      %v726 = vadd.f32 %v687, %v702
      %v727 = vadd.f32 %v688, %v702
      %v728 = vadd.f32 %v689, %v702
      %v729 = vadd.f32 %v690, %v702
      %v730 = vadd.f32 %v691, %v702
      %v731 = vadd.f32 %v692, %v702
      %v732 = vadd.f32 %v693, %v702
      %v733 = vadd.f32 %v694, %v702
      %v734 = vadd.f32 %v695, %v702
      %v735 = vadd.f32 %v696, %v702
      %736 = vst [vmem:[#allocation7] sm:$0xff] %v704
      %737 = vst [vmem:[#allocation7 + $0x8] sm:$0xff] %v705
      %738 = vst [vmem:[#allocation7 + $0x10] sm:$0xff] %v706
      %739 = vst [vmem:[#allocation7 + $0x18] sm:$0xff] %v707
      %740 = vst [vmem:[#allocation7 + $0x20] sm:$0xff] %v708
      %741 = vst [vmem:[#allocation7 + $0x28] sm:$0xff] %v709
      %742 = vst [vmem:[#allocation7 + $0x30] sm:$0xff] %v710
      %743 = vst [vmem:[#allocation7 + $0x38] sm:$0xff] %v711
      %744 = vst [vmem:[#allocation7 + $0x40] sm:$0xff] %v712
      %745 = vst [vmem:[#allocation7 + $0x48] sm:$0xff] %v713
      %746 = vst [vmem:[#allocation7 + $0x50] sm:$0xff] %v714
      %747 = vst [vmem:[#allocation7 + $0x58] sm:$0xff] %v715
      %748 = vst [vmem:[#allocation7 + $0x60] sm:$0xff] %v716
      %749 = vst [vmem:[#allocation7 + $0x68] sm:$0xff] %v717
      %750 = vst [vmem:[#allocation7 + $0x70] sm:$0xff] %v718
      %751 = vst [vmem:[#allocation7 + $0x78] sm:$0xff] %v719
      %752 = vst [vmem:[#allocation7 + $0x80] sm:$0xff] %v720
      %753 = vst [vmem:[#allocation7 + $0x88] sm:$0xff] %v721
      %754 = vst [vmem:[#allocation7 + $0x90] sm:$0xff] %v722
      %755 = vst [vmem:[#allocation7 + $0x98] sm:$0xff] %v723
      %756 = vst [vmem:[#allocation7 + $0xa0] sm:$0xff] %v724
      %757 = vst [vmem:[#allocation7 + $0xa8] sm:$0xff] %v725
      %758 = vst [vmem:[#allocation7 + $0xb0] sm:$0xff] %v726
      %759 = vst [vmem:[#allocation7 + $0xb8] sm:$0xff] %v727
      %760 = vst [vmem:[#allocation7 + $0xc0] sm:$0xff] %v728
      %761 = vst [vmem:[#allocation7 + $0xc8] sm:$0xff] %v729
      %762 = vst [vmem:[#allocation7 + $0xd0] sm:$0xff] %v730
      %763 = vst [vmem:[#allocation7 + $0xd8] sm:$0xff] %v731
      %764 = vst [vmem:[#allocation7 + $0xe0] sm:$0xff] %v732
      %765 = vst [vmem:[#allocation7 + $0xe8] sm:$0xff] %v733
      %766 = vst [vmem:[#allocation7 + $0xf0] sm:$0xff] %v734
      %767 = vst [vmem:[#allocation7 + $0xf8] sm:$0xff] %v735
    $region29: #{tpu_custom_call.1} parent=1 // pred_fallthru
      _
    // Predicated region
    $region30: #{tpu_custom_call.1} parent=1 // pred_check
      _
    $region31: #{tpu_custom_call.1} parent=1 // pred_check_branch
      %769 = sbr.rel (0) target = $region33
    $region32: #{tpu_custom_call.1} parent=1 // pred_region
      %s771 = ssub.s32 4096, 4096
      %772 = vsyncadd [#allocation4], %s771
      %s773 = sshll.u32 [#allocation7], 4
      %s774 = int_to_ptr.vmem [resolvable:$true] %s773
      %779 = dma.vmem_to_hbm [thread:$0]  %s774, 4096, %s3, [#allocation4], 128, 128, 8
    $region33: #{tpu_custom_call.1} parent=1 // pred_fallthru
      _
    // Predicated region
    $region34: #{tpu_custom_call.1} parent=1 // pred_check
      _
    $region35: #{tpu_custom_call.1} parent=1 // pred_check_branch
      %781 = sbr.rel (0) target = $region37
    $region36: #{tpu_custom_call.1} parent=1 // pred_region
      %782 = dma.done [#allocation4], 4096
    $region37: #{tpu_custom_call.1} parent=1 // pred_fallthru
      _
    %783 = vsyncpa [#allocation3], 1
    %784 = vsyncpa [#allocation6], 1
    %785 = vsyncpa [#allocation4], 1

</llo_original>
